<compile_context>
chip_gen: v7x
topology: tpu7x:2x2x1
jax: 0.10.0
libtpu: 0.0.40
codegen_flags: <defaults>
</compile_context>

<pallas_src>
import functools

import numpy as np

import jax
import jax.numpy as jnp
from jax.experimental import pallas as pl
from jax.experimental.pallas import tpu as pltpu


_LANE = 128
_VMEM_LIMIT_BYTES = 48 * 1024 * 1024   # scoped-VMEM limit requested from Mosaic
_FUSED_VMEM_BUDGET = 36 * 1024 * 1024  # gate for the "m resident in VMEM" path
                                        # (leaves headroom under v7x's 64 MiB)


def _round_up(n, m):
    return ((n + m - 1) // m) * m


def _largest_tile(dim, cap):
    """Largest multiple of 128 that divides `dim` (itself a 128-multiple), <= cap."""
    t = min(dim, cap)
    while t > 128:
        if dim % t == 0:
            return t
        t -= _LANE
    return _LANE


def _pad2d(x, rows, cols):
    pr, pc = rows - x.shape[0], cols - x.shape[1]
    if pr or pc:
        x = jnp.pad(x, ((0, pr), (0, pc)))
    return x


# ---------------------------------------------------------------------------
# Fused path: grid over K only.  m lives in a VMEM scratch; the last K step
# computes y = m + m@m on the resident m and writes BOTH halves of the
# cat(dim=1) output (out[:, :N] = out[:, N:] = y) -- m never touches HBM.
# ---------------------------------------------------------------------------
def _fused_kernel(x1_ref, x2_ref, out_ref, m_acc, *, mxu_dtype):
    k = pl.program_id(0)

    @pl.when(k == 0)
    def _init():
        m_acc[...] = jnp.zeros_like(m_acc)

    m_acc[...] += jnp.dot(x1_ref[...], x2_ref[...],
                          preferred_element_type=jnp.float32)

    @pl.when(k == pl.num_programs(0) - 1)
    def _finalize():
        m = m_acc[...]                     # (Mp, Np) f32, resident in VMEM
        mm = m.astype(mxu_dtype)           # bf16 MXU operands when enabled
        y = (m + jnp.dot(mm, mm, preferred_element_type=jnp.float32)
             ).astype(out_ref.dtype)
        n = y.shape[1]
        out_ref[:, :n] = y                 # v0 half of cat(..., dim=1)
        out_ref[:, n:] = y                 # v1 half (v1 == v0)


def _fused_plan(Mp, Np, Kp, in_itemsize):
    tk = _largest_tile(Kp, 512)
    vmem = (2 * (Mp * tk + tk * Np) * in_itemsize   # double-buffered input blocks
            + Mp * Np * 4                           # resident m accumulator
            + 2 * Mp * (2 * Np) * 4)                # output block (worst case x2)
    return tk, vmem


def _fused_forward(x1p, x2p, *, mxu_dtype):
    Mp, Kp = x1p.shape
    _, Np = x2p.shape
    in_itemsize = np.dtype(mxu_dtype).itemsize
    tk, _ = _fused_plan(Mp, Np, Kp, in_itemsize)
    grid = (Kp // tk,)
    cost = pl.CostEstimate(
        flops=2 * Mp * Np * Kp + 2 * Mp * Np * Np + Mp * Np,
        transcendentals=0,
        bytes_accessed=int((Mp * Kp + Kp * Np) * in_itemsize + Mp * 2 * Np * 4),
    )
    return pl.pallas_call(
        functools.partial(_fused_kernel, mxu_dtype=mxu_dtype),
        out_shape=jax.ShapeDtypeStruct((Mp, 2 * Np), jnp.float32),
        grid_spec=pltpu.PrefetchScalarGridSpec(
            num_scalar_prefetch=0,
            grid=grid,
            in_specs=[
                pl.BlockSpec((Mp, tk), lambda k: (0, k)),
                pl.BlockSpec((tk, Np), lambda k: (k, 0)),
            ],
            out_specs=pl.BlockSpec((Mp, 2 * Np), lambda k: (0, 0)),
            scratch_shapes=[pltpu.VMEM((Mp, Np), jnp.float32)],
        ),
        compiler_params=pltpu.CompilerParams(
            # Pure-reduction grid -> single TensorCore; acceptable for the
            # small/medium problems this path is gated to (m must fit VMEM).
            dimension_semantics=("arbitrary",),
            vmem_limit_bytes=_VMEM_LIMIT_BYTES,
        ),
        cost_estimate=cost,
    )(x1p.astype(mxu_dtype), x2p.astype(mxu_dtype))


# ---------------------------------------------------------------------------
# Two-stage fallback (m too big for a resident VMEM copy).
# Stage 1: m = x1 @ x2 (tiled, f32 VMEM accumulator).
# ---------------------------------------------------------------------------
def _matmul_kernel(a_ref, b_ref, o_ref, acc_ref):
    @pl.when(pl.program_id(2) == 0)
    def _init():
        acc_ref[...] = jnp.zeros_like(acc_ref)

    acc_ref[...] += jnp.dot(a_ref[...], b_ref[...],
                            preferred_element_type=jnp.float32)

    @pl.when(pl.program_id(2) == pl.num_programs(2) - 1)
    def _finalize():
        o_ref[...] = acc_ref[...].astype(o_ref.dtype)


def _tiled_matmul(a, b, *, out_dtype):
    M, K = a.shape
    _, N = b.shape
    itemsize = a.dtype.itemsize
    tm = _largest_tile(M, 512)
    tn = _largest_tile(N, 512)
    tk = _largest_tile(K, 1024)            # reduction tile may exceed tm/tn
    # Shrink the reduction tile if the double-buffered blocks would blow VMEM.
    while tk > 128 and (2 * (tm * tk + tk * tn) * itemsize
                        + tm * tn * 4
                        + 2 * tm * tn * np.dtype(out_dtype).itemsize
                        ) > _FUSED_VMEM_BUDGET:
        tk = _largest_tile(K, tk - _LANE)
    grid = (M // tm, N // tn, K // tk)
    cost = pl.CostEstimate(
        flops=2 * M * N * K,
        transcendentals=0,
        bytes_accessed=int((N // tn) * M * K * itemsize       # A re-read per j
                           + (M // tm) * K * N * itemsize     # B re-read per i
                           + M * N * np.dtype(out_dtype).itemsize),
    )
    return pl.pallas_call(
        _matmul_kernel,
        out_shape=jax.ShapeDtypeStruct((M, N), out_dtype),
        grid_spec=pltpu.PrefetchScalarGridSpec(
            num_scalar_prefetch=0,
            grid=grid,
            in_specs=[
                pl.BlockSpec((tm, tk), lambda i, j, k: (i, k)),
                pl.BlockSpec((tk, tn), lambda i, j, k: (k, j)),
            ],
            out_specs=pl.BlockSpec((tm, tn), lambda i, j, k: (i, j)),
            scratch_shapes=[pltpu.VMEM((tm, tn), jnp.float32)],
        ),
        compiler_params=pltpu.CompilerParams(
            dimension_semantics=("parallel", "parallel", "arbitrary"),
            vmem_limit_bytes=_VMEM_LIMIT_BYTES,
        ),
        cost_estimate=cost,
    )(a, b)


# ---------------------------------------------------------------------------
# Stage 2: y = m + m @ m.  The residual m[i, j] is folded in at the k == j
# step from the A block already in VMEM (requires tm == tk == tn).
# ---------------------------------------------------------------------------
def _self_matmul_plus_kernel(a_ik_ref, a_kj_ref, o_ref, acc_ref):
    j = pl.program_id(1)
    k = pl.program_id(2)

    @pl.when(k == 0)
    def _init():
        acc_ref[...] = jnp.zeros_like(acc_ref)

    # Residual `+ m[i, j]`: with square tiles the A block at k == j IS m[i, j],
    # so no third input / extra HBM read of m is needed.
    @pl.when(k == j)
    def _residual():
        acc_ref[...] += a_ik_ref[...].astype(jnp.float32)

    acc_ref[...] += jnp.dot(a_ik_ref[...], a_kj_ref[...],
                            preferred_element_type=jnp.float32)

    @pl.when(k == pl.num_programs(2) - 1)
    def _finalize():
        o_ref[...] = acc_ref[...].astype(o_ref.dtype)


def _tiled_self_matmul_plus(m, *, out_dtype=jnp.float32):
    """y = m + m @ m for square, lane-aligned m (two-stage fallback, stage 2)."""
    N = m.shape[0]
    assert m.shape == (N, N)
    ts = _largest_tile(N, 512)      # tm == tn == tk, required by the k == j fold
    grid = (N // ts, N // ts, N // ts)
    itemsize = m.dtype.itemsize
    cost = pl.CostEstimate(
        flops=2 * N * N * N + N * N,
        transcendentals=0,
        bytes_accessed=int(2 * (N // ts) * N * N * itemsize
                           + N * N * np.dtype(out_dtype).itemsize),
    )
    return pl.pallas_call(
        _self_matmul_plus_kernel,
        out_shape=jax.ShapeDtypeStruct((N, N), out_dtype),
        grid_spec=pltpu.PrefetchScalarGridSpec(
            num_scalar_prefetch=0,
            grid=grid,
            in_specs=[
                pl.BlockSpec((ts, ts), lambda i, j, k: (i, k)),   # m[i, k]
                pl.BlockSpec((ts, ts), lambda i, j, k: (k, j)),   # m[k, j]
            ],
            out_specs=pl.BlockSpec((ts, ts), lambda i, j, k: (i, j)),
            scratch_shapes=[pltpu.VMEM((ts, ts), jnp.float32)],
        ),
        compiler_params=pltpu.CompilerParams(
            dimension_semantics=("parallel", "parallel", "arbitrary"),
            vmem_limit_bytes=_VMEM_LIMIT_BYTES,
        ),
        cost_estimate=cost,
    )(m, m)


# ---------------------------------------------------------------------------
# Forward
# ---------------------------------------------------------------------------
def cat_mm_forward(x1, x2, x3, *, use_bf16=False, force_two_stage=False):
    """Mirrors Model.forward for 2-D inputs (its only well-defined path)."""
    assert x1.ndim == 2 and x2.ndim == 2 and x3.ndim == 2
    M, K = x1.shape
    K2, N = x2.shape
    assert K == K2 and N == M, "torch.mm(v, v) requires x1 @ x2 to be square"

    # TODO(synk): F.interpolate(x1, (100,100)/(105,105), mode='bilinear') on a
    # 2-D tensor is invalid in PyTorch (needs 4-D NCHW input) and raises at
    # runtime in the original module, so that branch is omitted.

    # Zero-pad to lane-aligned shapes (exact for matmul + residual); slice back.
    Mp, Np, Kp = _round_up(M, _LANE), _round_up(N, _LANE), _round_up(K, _LANE)
    x1p = _pad2d(x1, Mp, Kp)
    x2p = _pad2d(x2, Kp, Np)

    mxu_dtype = jnp.bfloat16 if use_bf16 else jnp.float32
    _, fused_vmem = _fused_plan(Mp, Np, Kp, np.dtype(mxu_dtype).itemsize)

    if not force_two_stage and fused_vmem <= _FUSED_VMEM_BUDGET:
        # Fused single-kernel path (also covers tiny shapes like the 3x3 case:
        # one pallas_call, no HBM round trip of m, no external cast / concat).
        out_p = _fused_forward(x1p, x2p, mxu_dtype=mxu_dtype)    # (Mp, 2*Np)
        if Mp == M and Np == N:
            return out_p
        return jnp.concatenate([out_p[:M, :N], out_p[:M, Np:Np + N]], axis=1)

    # Two-stage fallback for matrices whose m does not fit in VMEM.
    # Stage 1 emits m directly in the MXU operand dtype (no separate cast pass).
    m = _tiled_matmul(x1p.astype(mxu_dtype), x2p.astype(mxu_dtype),
                      out_dtype=mxu_dtype)
    y = _tiled_self_matmul_plus(m, out_dtype=jnp.float32)[:M, :N]
    # v0 == v1: cat(dim=1) just duplicates y.  Kept in the wrapper for this
    # fallback: the two column windows of (M, 2N) are disjoint per (i, j) tile
    # and an in-kernel write would need sublane-masked (M, 2, N) stores; the
    # fused path above avoids the concat entirely.
    return jnp.concatenate([y, y], axis=1)


if __name__ == "__main__":
    key = jax.random.PRNGKey(0)
    k1, k2, k4, k5 = jax.random.split(key, 4)

    def reference(a, b):
        hp = jax.lax.Precision.HIGHEST           # accurate f32 reference
        m = jnp.dot(a, b, precision=hp)
        y = m + jnp.dot(m, m, precision=hp)
        return jnp.concatenate([y, y], axis=1)

    def check(out, ref, name):
        o = np.asarray(out, dtype=np.float64)
        r = np.asarray(ref, dtype=np.float64)
        assert o.shape == r.shape, (name, o.shape, r.shape)
        rel = np.max(np.abs(o - r)) / max(np.max(np.abs(r)), 1e-6)
        assert rel < 3e-2, (name, float(rel))

    # 1) Module-sized inputs (3x3, exactly as in the original spec).
    x1 = jax.random.normal(k1, (3, 3), dtype=jnp.float32)
    x2 = jax.random.normal(k2, (3, 3), dtype=jnp.float32)
    x3 = jnp.zeros((3, 3), dtype=jnp.float32)    # only shape-checked by the model
    out = cat_mm_forward(x1, x2, x3)
    jax.block_until_ready(out)
    assert out.shape == (3, 6), out.shape
    check(out, reference(x1, x2), "3x3 fused")

    # 2) Multi-K-tile fused path (640 = 5 x 128; scaled so m and m@m have
    #    comparable magnitude and the residual is visible in the check).
    Mb = 640
    y1 = 0.05 * jax.random.normal(k4, (Mb, Mb), dtype=jnp.float32)
    y2 = 0.05 * jax.random.normal(k5, (Mb, Mb), dtype=jnp.float32)
    ref_b = reference(y1, y2)
    out_b = cat_mm_forward(y1, y2, y1)
    jax.block_until_ready(out_b)
    assert out_b.shape == (Mb, 2 * Mb), out_b.shape
    check(out_b, ref_b, "640 fused")

    # 3) Same problem through the large-matrix two-stage fallback path
    #    (multi-tile i/j/k grid exercising the k == j residual fold).
    out_c = cat_mm_forward(y1, y2, y1, force_two_stage=True)
    jax.block_until_ready(out_c)
    check(out_c, ref_b, "640 two-stage")

    print("KERNEL_OK")
</pallas_src>

<mosaic_0001>
module attributes {stable_mosaic.version = 11 : i64} {
  func.func @_fused_kernel(%arg0: i32, %arg1: memref<128x128xf32, #tpu.memory_space<vmem>>, %arg2: memref<128x128xf32, #tpu.memory_space<vmem>>, %arg3: memref<128x256xf32, #tpu.memory_space<vmem>>, %arg4: memref<128x128xf32, #tpu.memory_space<vmem>>) attributes {dimension_semantics = [#tpu.dimension_semantics<arbitrary>], iteration_bounds = array<i64: 1>, scalar_prefetch = 0 : i64, scratch_operands = 1 : i64, tpu.core_type = #tpu.core_type<tc>, window_params = [{transform_indices = @transform_0, window_bounds = array<i64: 128, 128>}, {transform_indices = @transform_1, window_bounds = array<i64: 128, 128>}, {pipeline_mode = #tpu.pipeline_mode<synchronous>, transform_indices = @transform_2, window_bounds = array<i64: 128, 256>}]} {
    %c0_i32 = arith.constant 0 : i32
    %0 = arith.cmpi eq, %arg0, %c0_i32 : i32
    %1 = arith.extui %0 : i1 to i32
    %c0_i32_0 = arith.constant 0 : i32
    %2 = arith.cmpi ne, %1, %c0_i32_0 : i32
    scf.if %2 {
      %cst_10 = arith.constant 0.000000e+00 : f32
      %12 = vector.broadcast %cst_10 : f32 to vector<128x128xf32>
      %c0_11 = arith.constant 0 : index
      %c0_12 = arith.constant 0 : index
      %13 = vector.load %arg4[%c0_11, %c0_12] : memref<128x128xf32, #tpu.memory_space<vmem>>, vector<128x128xf32>
      tpu.vector_store %arg4[%c0_11, %c0_12], %12 {strides = array<i32>} : memref<128x128xf32, #tpu.memory_space<vmem>>, vector<128x128xf32>,
    } else {
    }
    %c0 = arith.constant 0 : index
    %c0_1 = arith.constant 0 : index
    %3 = vector.load %arg4[%c0, %c0_1] : memref<128x128xf32, #tpu.memory_space<vmem>>, vector<128x128xf32>
    %c0_2 = arith.constant 0 : index
    %c0_3 = arith.constant 0 : index
    %4 = vector.load %arg1[%c0_2, %c0_3] : memref<128x128xf32, #tpu.memory_space<vmem>>, vector<128x128xf32>
    %c0_4 = arith.constant 0 : index
    %c0_5 = arith.constant 0 : index
    %5 = vector.load %arg2[%c0_4, %c0_5] : memref<128x128xf32, #tpu.memory_space<vmem>>, vector<128x128xf32>
    %cst = arith.constant dense<0.000000e+00> : vector<128x128xf32>
    %6 = tpu.matmul %4, %5, %cst {dimension_numbers = #tpu.dot_dimension_numbers<[1], [0], [0], [1], [0, 0, 1, 1], [], []>} : vector<128x128xf32>, vector<128x128xf32>, vector<128x128xf32> -> vector<128x128xf32>
    %7 = arith.addf %3, %6 : vector<128x128xf32>
    %c0_6 = arith.constant 0 : index
    %c0_7 = arith.constant 0 : index
    %8 = vector.load %arg4[%c0_6, %c0_7] : memref<128x128xf32, #tpu.memory_space<vmem>>, vector<128x128xf32>
    tpu.vector_store %arg4[%c0_6, %c0_7], %7 {strides = array<i32>} : memref<128x128xf32, #tpu.memory_space<vmem>>, vector<128x128xf32>,
    %c0_i32_8 = arith.constant 0 : i32
    %9 = arith.cmpi eq, %arg0, %c0_i32_8 : i32
    %10 = arith.extui %9 : i1 to i32
    %c0_i32_9 = arith.constant 0 : i32
    %11 = arith.cmpi ne, %10, %c0_i32_9 : i32
    scf.if %11 {
      %c0_10 = arith.constant 0 : index
      %c0_11 = arith.constant 0 : index
      %12 = vector.load %arg4[%c0_10, %c0_11] : memref<128x128xf32, #tpu.memory_space<vmem>>, vector<128x128xf32>
      %cst_12 = arith.constant dense<0.000000e+00> : vector<128x128xf32>
      %13 = tpu.matmul %12, %12, %cst_12 {dimension_numbers = #tpu.dot_dimension_numbers<[1], [0], [0], [1], [0, 0, 1, 1], [], []>} : vector<128x128xf32>, vector<128x128xf32>, vector<128x128xf32> -> vector<128x128xf32>
      %14 = arith.addf %12, %13 : vector<128x128xf32>
      %c0_13 = arith.constant 0 : index
      %c0_14 = arith.constant 0 : index
      %15 = vector.load %arg3[%c0_13, %c0_14] : memref<128x256xf32, #tpu.memory_space<vmem>>, vector<128x128xf32>
      tpu.vector_store %arg3[%c0_13, %c0_14], %14 {strides = array<i32>} : memref<128x256xf32, #tpu.memory_space<vmem>>, vector<128x128xf32>,
      %c0_15 = arith.constant 0 : index
      %c128 = arith.constant 128 : index
      %16 = vector.load %arg3[%c0_15, %c128] : memref<128x256xf32, #tpu.memory_space<vmem>>, vector<128x128xf32>
      tpu.vector_store %arg3[%c0_15, %c128], %14 {strides = array<i32>} : memref<128x256xf32, #tpu.memory_space<vmem>>, vector<128x128xf32>,
    } else {
    }
    return
  }
  func.func @transform_0(%arg0: i32) -> (i32, i32) {
    %c0_i32 = arith.constant 0 : i32
    %c0_i32_0 = arith.constant 0 : i32
    return %c0_i32, %arg0 : i32, i32
  }
  func.func @transform_1(%arg0: i32) -> (i32, i32) {
    %c0_i32 = arith.constant 0 : i32
    %c0_i32_0 = arith.constant 0 : i32
    return %arg0, %c0_i32 : i32, i32
  }
  func.func @transform_2(%arg0: i32) -> (i32, i32) {
    %c0_i32 = arith.constant 0 : i32
    %c0_i32_0 = arith.constant 0 : i32
    %c0_i32_1 = arith.constant 0 : i32
    return %c0_i32, %c0_i32_0 : i32, i32
  }
}

</mosaic_0001>

<llo_original>
// kernel: tpu_custom_call.1
$region0: #{tpu_custom_call.1}
  #allocation0 [shape = 'u32[]', space=smem, size = 0x4, offset = 0x4, fixed_abs, tag = 'smem constant byte address 0x4 - core index']
  #allocation1 [shape = 'u32[144,128]{1,0:T(1,128)}', space=vmem, size = 0x12000, scoped, tag = 'internal scratch']
  #allocation2 [shape = 'f32[128,128]{1,0:T(8,128)}', space=vmem, size = 0x10000, scoped, tag = 'scratch operand']
  %s0 = inlined_call_operand.hbm [shape: f32[128,128], index: 0, kind: input, shape index: {}]
  %s1 = inlined_call_operand.hbm [shape: f32[128,128], index: 1, kind: input, shape index: {}]
  %s2 = inlined_call_operand.hbm [shape: f32[128,256], index: 2, kind: output, shape index: {}]
  %s3 = sld [smem:[#allocation0]]
  $region34: #{tpu_custom_call.1} parent=0
    _
  %s5 = ssub.s32 1, %s3
  %s6 = scalar_select 0, %s5, %s3
  $region1: #{tpu_custom_call.1} parent=0
    #allocation3 [shape = 'u8[65536]{0}', space=vmem, size = 0x10000, scoped, tag = 'input window, operand 0, single buffered']
    #allocation4 [shape = 's32[1]{0}', space=sflag, size = 0x4, scoped, tag = 'scoped memory for tpu_custom_call.1']
    #allocation5 [shape = 's32[1]{0}', space=sflag, size = 0x4, scoped, tag = 'scoped memory for tpu_custom_call.1']
    #allocation6 [shape = 'u8[65536]{0}', space=vmem, size = 0x10000, scoped, tag = 'input window, operand 1, single buffered']
    #allocation7 [shape = 's32[1]{0}', space=sflag, size = 0x4, scoped, tag = 'scoped memory for tpu_custom_call.1']
    #allocation8 [shape = 'u8[131072]{0}', space=vmem, size = 0x20000, scoped, tag = 'output window, operand 0, single buffered']
    %7 = vsyncpa [#allocation4], 0
    %8 = vsyncpa [#allocation7], 0
    %9 = vsyncpa [#allocation5], 0
    // Predicated region
    $region2: #{tpu_custom_call.1} parent=1 // pred_check
      _
    $region3: #{tpu_custom_call.1} parent=1 // pred_check_branch
      %11 = sbr.rel (0) target = $region5
    $region4: #{tpu_custom_call.1} parent=1 // pred_region
      %s13 = ssub.s32 2048, 2048
      %14 = vsyncadd [#allocation4], %s13
      %s15 = sshll.u32 [#allocation3], 4
      %s16 = int_to_ptr.vmem [resolvable:$true] %s15
      %21 = dma.hbm_to_vmem [thread:$0]  %s0, 2048, %s16, [#allocation4], 128, 128, 8
    $region5: #{tpu_custom_call.1} parent=1 // pred_fallthru
      _
    // Predicated region
    $region6: #{tpu_custom_call.1} parent=1 // pred_check
      _
    $region7: #{tpu_custom_call.1} parent=1 // pred_check_branch
      %23 = sbr.rel (0) target = $region9
    $region8: #{tpu_custom_call.1} parent=1 // pred_region
      %s25 = ssub.s32 2048, 2048
      %26 = vsyncadd [#allocation7], %s25
      %s27 = sshll.u32 [#allocation6], 4
      %s28 = int_to_ptr.vmem [resolvable:$true] %s27
      %33 = dma.hbm_to_vmem [thread:$0]  %s1, 2048, %s28, [#allocation7], 128, 128, 8
    $region9: #{tpu_custom_call.1} parent=1 // pred_fallthru
      _
    // Predicated region
    $region10: #{tpu_custom_call.1} parent=1 // pred_check
      _
    $region11: #{tpu_custom_call.1} parent=1 // pred_check_branch
      %35 = sbr.rel (0) target = $region13
    $region12: #{tpu_custom_call.1} parent=1 // pred_region
      %36 = dma.done [#allocation4], 2048
    $region13: #{tpu_custom_call.1} parent=1 // pred_fallthru
      _
    // Predicated region
    $region14: #{tpu_custom_call.1} parent=1 // pred_check
      _
    $region15: #{tpu_custom_call.1} parent=1 // pred_check_branch
      %38 = sbr.rel (0) target = $region17
    $region16: #{tpu_custom_call.1} parent=1 // pred_region
      %39 = dma.done [#allocation7], 2048
    $region17: #{tpu_custom_call.1} parent=1 // pred_fallthru
      _
    %p40 = scmp.eq.s32.totalorder 0, 0
    // Predicated region
    $region18: #{tpu_custom_call.1} parent=1 // pred_check
      %p41 = pneg %p40
    $region19: #{tpu_custom_call.1} parent=1 // pred_check_branch
      %43 = sbr.rel (%p41) target = $region21
    $region20: #{tpu_custom_call.1} parent=1 // pred_region
      %44 = vst [vmem:[#allocation2] sm:$0xff] 0.0
      %45 = vst [vmem:[#allocation2 + $0x8] sm:$0xff] 0.0
      %46 = vst [vmem:[#allocation2 + $0x10] sm:$0xff] 0.0
      %47 = vst [vmem:[#allocation2 + $0x18] sm:$0xff] 0.0
      %48 = vst [vmem:[#allocation2 + $0x20] sm:$0xff] 0.0
      %49 = vst [vmem:[#allocation2 + $0x28] sm:$0xff] 0.0
      %50 = vst [vmem:[#allocation2 + $0x30] sm:$0xff] 0.0
      %51 = vst [vmem:[#allocation2 + $0x38] sm:$0xff] 0.0
      %52 = vst [vmem:[#allocation2 + $0x40] sm:$0xff] 0.0
      %53 = vst [vmem:[#allocation2 + $0x48] sm:$0xff] 0.0
      %54 = vst [vmem:[#allocation2 + $0x50] sm:$0xff] 0.0
      %55 = vst [vmem:[#allocation2 + $0x58] sm:$0xff] 0.0
      %56 = vst [vmem:[#allocation2 + $0x60] sm:$0xff] 0.0
      %57 = vst [vmem:[#allocation2 + $0x68] sm:$0xff] 0.0
      %58 = vst [vmem:[#allocation2 + $0x70] sm:$0xff] 0.0
      %59 = vst [vmem:[#allocation2 + $0x78] sm:$0xff] 0.0
    $region21: #{tpu_custom_call.1} parent=1 // pred_fallthru
      _
    %v60 = vld [vmem:[#allocation2] sm:$0xff]
    %v61 = vld [vmem:[#allocation2 + $0x8] sm:$0xff]
    %v62 = vld [vmem:[#allocation2 + $0x10] sm:$0xff]
    %v63 = vld [vmem:[#allocation2 + $0x18] sm:$0xff]
    %v64 = vld [vmem:[#allocation2 + $0x20] sm:$0xff]
    %v65 = vld [vmem:[#allocation2 + $0x28] sm:$0xff]
    %v66 = vld [vmem:[#allocation2 + $0x30] sm:$0xff]
    %v67 = vld [vmem:[#allocation2 + $0x38] sm:$0xff]
    %v68 = vld [vmem:[#allocation2 + $0x40] sm:$0xff]
    %v69 = vld [vmem:[#allocation2 + $0x48] sm:$0xff]
    %v70 = vld [vmem:[#allocation2 + $0x50] sm:$0xff]
    %v71 = vld [vmem:[#allocation2 + $0x58] sm:$0xff]
    %v72 = vld [vmem:[#allocation2 + $0x60] sm:$0xff]
    %v73 = vld [vmem:[#allocation2 + $0x68] sm:$0xff]
    %v74 = vld [vmem:[#allocation2 + $0x70] sm:$0xff]
    %v75 = vld [vmem:[#allocation2 + $0x78] sm:$0xff]
    %v76 = vld [vmem:[#allocation3] sm:$0xff]
    %v77 = vld [vmem:[#allocation3 + $0x8] sm:$0xff]
    %v78 = vld [vmem:[#allocation3 + $0x10] sm:$0xff]
    %v79 = vld [vmem:[#allocation3 + $0x18] sm:$0xff]
    %v80 = vld [vmem:[#allocation3 + $0x20] sm:$0xff]
    %v81 = vld [vmem:[#allocation3 + $0x28] sm:$0xff]
    %v82 = vld [vmem:[#allocation3 + $0x30] sm:$0xff]
    %v83 = vld [vmem:[#allocation3 + $0x38] sm:$0xff]
    %v84 = vld [vmem:[#allocation3 + $0x40] sm:$0xff]
    %v85 = vld [vmem:[#allocation3 + $0x48] sm:$0xff]
    %v86 = vld [vmem:[#allocation3 + $0x50] sm:$0xff]
    %v87 = vld [vmem:[#allocation3 + $0x58] sm:$0xff]
    %v88 = vld [vmem:[#allocation3 + $0x60] sm:$0xff]
    %v89 = vld [vmem:[#allocation3 + $0x68] sm:$0xff]
    %v90 = vld [vmem:[#allocation3 + $0x70] sm:$0xff]
    %v91 = vld [vmem:[#allocation3 + $0x78] sm:$0xff]
    %v92 = vld [vmem:[#allocation6] sm:$0xff]
    %v93 = vld [vmem:[#allocation6 + $0x8] sm:$0xff]
    %v94 = vld [vmem:[#allocation6 + $0x10] sm:$0xff]
    %v95 = vld [vmem:[#allocation6 + $0x18] sm:$0xff]
    %v96 = vld [vmem:[#allocation6 + $0x20] sm:$0xff]
    %v97 = vld [vmem:[#allocation6 + $0x28] sm:$0xff]
    %v98 = vld [vmem:[#allocation6 + $0x30] sm:$0xff]
    %v99 = vld [vmem:[#allocation6 + $0x38] sm:$0xff]
    %v100 = vld [vmem:[#allocation6 + $0x40] sm:$0xff]
    %v101 = vld [vmem:[#allocation6 + $0x48] sm:$0xff]
    %v102 = vld [vmem:[#allocation6 + $0x50] sm:$0xff]
    %v103 = vld [vmem:[#allocation6 + $0x58] sm:$0xff]
    %v104 = vld [vmem:[#allocation6 + $0x60] sm:$0xff]
    %v105 = vld [vmem:[#allocation6 + $0x68] sm:$0xff]
    %v106 = vld [vmem:[#allocation6 + $0x70] sm:$0xff]
    %v107 = vld [vmem:[#allocation6 + $0x78] sm:$0xff]
    %108 = vmatprep.subr.mxu0 0.0
    %109 = vmatpush1.msra.mxu0 %v92
    %110 = vmatprep.subr.mxu0 0.0
    %111 = vmatpush1.msra.mxu0 %v93
    %112 = vmatprep.subr.mxu0 0.0
    %113 = vmatpush1.msra.mxu0 %v94
    %114 = vmatprep.subr.mxu0 0.0
    %115 = vmatpush1.msra.mxu0 %v95
    %116 = vmatprep.subr.mxu0 0.0
    %117 = vmatpush1.msra.mxu0 %v96
    %118 = vmatprep.subr.mxu0 0.0
    %119 = vmatpush1.msra.mxu0 %v97
    %120 = vmatprep.subr.mxu0 0.0
    %121 = vmatpush1.msra.mxu0 %v98
    %122 = vmatprep.subr.mxu0 0.0
    %123 = vmatpush1.msra.mxu0 %v99
    %124 = vmatprep.subr.mxu0 0.0
    %125 = vmatpush1.msra.mxu0 %v100
    %126 = vmatprep.subr.mxu0 0.0
    %127 = vmatpush1.msra.mxu0 %v101
    %128 = vmatprep.subr.mxu0 0.0
    %129 = vmatpush1.msra.mxu0 %v102
    %130 = vmatprep.subr.mxu0 0.0
    %131 = vmatpush1.msra.mxu0 %v103
    %132 = vmatprep.subr.mxu0 0.0
    %133 = vmatpush1.msra.mxu0 %v104
    %134 = vmatprep.subr.mxu0 0.0
    %135 = vmatpush1.msra.mxu0 %v105
    %136 = vmatprep.subr.mxu0 0.0
    %137 = vmatpush1.msra.mxu0 %v106
    %138 = vmatprep.subr.mxu0 0.0
    %139 = vmatpush1.msra.mxu0 %v107
    %140 = vmatprep.subr.mxu0 0.0
    %141 = vmatpush1.msra.mxu0 0.0
    %142 = vmatprep.subr.mxu0 0.0
    %143 = vmatpush1.msra.mxu0 0.0
    %144 = vmatprep.subr.mxu0 0.0
    %145 = vmatpush1.msra.mxu0 0.0
    %146 = vmatprep.subr.mxu0 0.0
    %147 = vmatpush1.msra.mxu0 0.0
    %148 = vmatprep.subr.mxu0 0.0
    %149 = vmatpush1.msra.mxu0 0.0
    %150 = vmatprep.subr.mxu0 0.0
    %151 = vmatpush1.msra.mxu0 0.0
    %152 = vmatprep.subr.mxu0 0.0
    %153 = vmatpush1.msra.mxu0 0.0
    %154 = vmatprep.subr.mxu0 0.0
    %155 = vmatpush1.msra.mxu0 0.0
    %156 = vmatprep.subr.mxu0 0.0
    %157 = vmatpush1.msra.mxu0 0.0
    %158 = vmatprep.subr.mxu0 0.0
    %159 = vmatpush1.msra.mxu0 0.0
    %160 = vmatprep.subr.mxu0 0.0
    %161 = vmatpush1.msra.mxu0 0.0
    %162 = vmatprep.subr.mxu0 0.0
    %163 = vmatpush1.msra.mxu0 0.0
    %164 = vmatprep.subr.mxu0 0.0
    %165 = vmatpush1.msra.mxu0 0.0
    %166 = vmatprep.subr.mxu0 0.0
    %167 = vmatpush1.msra.mxu0 0.0
    %168 = vmatprep.subr.mxu0 0.0
    %169 = vmatpush1.msra.mxu0 0.0
    %170 = vmatprep.subr.mxu0 0.0
    %171 = vmatpush1.msra.mxu0 0.0
    %172 = vmatprep.mubr.f32.mxu0 0.0
    %173 = vmatmul.mubr.f32.gmra.mrb[0].mxu0 %v76
    %v174 = vpop.f32.mrb[0].mxu0
    %v175 = vadd.f32 0.0, %v174
    %v176 = vpop.f32.mrb[0].mxu0
    %177 = vmatprep.mubr.f32.mxu0 0.0
    %178 = vmatmul.mubr.f32.gmra.mrb[0].mxu0 %v77
    %v179 = vpop.f32.mrb[0].mxu0
    %v180 = vadd.f32 0.0, %v179
    %v181 = vpop.f32.mrb[0].mxu0
    %182 = vmatprep.mubr.f32.mxu0 0.0
    %183 = vmatmul.mubr.f32.gmra.mrb[0].mxu0 %v78
    %v184 = vpop.f32.mrb[0].mxu0
    %v185 = vadd.f32 0.0, %v184
    %v186 = vpop.f32.mrb[0].mxu0
    %187 = vmatprep.mubr.f32.mxu0 0.0
    %188 = vmatmul.mubr.f32.gmra.mrb[0].mxu0 %v79
    %v189 = vpop.f32.mrb[0].mxu0
    %v190 = vadd.f32 0.0, %v189
    %v191 = vpop.f32.mrb[0].mxu0
    %192 = vmatprep.mubr.f32.mxu0 0.0
    %193 = vmatmul.mubr.f32.gmra.mrb[0].mxu0 %v80
    %v194 = vpop.f32.mrb[0].mxu0
    %v195 = vadd.f32 0.0, %v194
    %v196 = vpop.f32.mrb[0].mxu0
    %197 = vmatprep.mubr.f32.mxu0 0.0
    %198 = vmatmul.mubr.f32.gmra.mrb[0].mxu0 %v81
    %v199 = vpop.f32.mrb[0].mxu0
    %v200 = vadd.f32 0.0, %v199
    %v201 = vpop.f32.mrb[0].mxu0
    %202 = vmatprep.mubr.f32.mxu0 0.0
    %203 = vmatmul.mubr.f32.gmra.mrb[0].mxu0 %v82
    %v204 = vpop.f32.mrb[0].mxu0
    %v205 = vadd.f32 0.0, %v204
    %v206 = vpop.f32.mrb[0].mxu0
    %207 = vmatprep.mubr.f32.mxu0 0.0
    %208 = vmatmul.mubr.f32.gmra.mrb[0].mxu0 %v83
    %v209 = vpop.f32.mrb[0].mxu0
    %v210 = vadd.f32 0.0, %v209
    %v211 = vpop.f32.mrb[0].mxu0
    %212 = vmatprep.mubr.f32.mxu0 0.0
    %213 = vmatmul.mubr.f32.gmra.mrb[0].mxu0 %v84
    %v214 = vpop.f32.mrb[0].mxu0
    %v215 = vadd.f32 0.0, %v214
    %v216 = vpop.f32.mrb[0].mxu0
    %217 = vmatprep.mubr.f32.mxu0 0.0
    %218 = vmatmul.mubr.f32.gmra.mrb[0].mxu0 %v85
    %v219 = vpop.f32.mrb[0].mxu0
    %v220 = vadd.f32 0.0, %v219
    %v221 = vpop.f32.mrb[0].mxu0
    %222 = vmatprep.mubr.f32.mxu0 0.0
    %223 = vmatmul.mubr.f32.gmra.mrb[0].mxu0 %v86
    %v224 = vpop.f32.mrb[0].mxu0
    %v225 = vadd.f32 0.0, %v224
    %v226 = vpop.f32.mrb[0].mxu0
    %227 = vmatprep.mubr.f32.mxu0 0.0
    %228 = vmatmul.mubr.f32.gmra.mrb[0].mxu0 %v87
    %v229 = vpop.f32.mrb[0].mxu0
    %v230 = vadd.f32 0.0, %v229
    %v231 = vpop.f32.mrb[0].mxu0
    %232 = vmatprep.mubr.f32.mxu0 0.0
    %233 = vmatmul.mubr.f32.gmra.mrb[0].mxu0 %v88
    %v234 = vpop.f32.mrb[0].mxu0
    %v235 = vadd.f32 0.0, %v234
    %v236 = vpop.f32.mrb[0].mxu0
    %237 = vmatprep.mubr.f32.mxu0 0.0
    %238 = vmatmul.mubr.f32.gmra.mrb[0].mxu0 %v89
    %v239 = vpop.f32.mrb[0].mxu0
    %v240 = vadd.f32 0.0, %v239
    %v241 = vpop.f32.mrb[0].mxu0
    %242 = vmatprep.mubr.f32.mxu0 0.0
    %243 = vmatmul.mubr.f32.gmra.mrb[0].mxu0 %v90
    %v244 = vpop.f32.mrb[0].mxu0
    %v245 = vadd.f32 0.0, %v244
    %v246 = vpop.f32.mrb[0].mxu0
    %247 = vmatprep.mubr.f32.mxu0 0.0
    %248 = vmatmul.mubr.f32.gmra.mrb[0].mxu0 %v91
    %v249 = vpop.f32.mrb[0].mxu0
    %v250 = vadd.f32 0.0, %v249
    %v251 = vpop.f32.mrb[0].mxu0
    %252 = vdwg.mxu0
    %v253 = vadd.f32 %v60, %v175
    %v254 = vadd.f32 %v61, %v180
    %v255 = vadd.f32 %v62, %v185
    %v256 = vadd.f32 %v63, %v190
    %v257 = vadd.f32 %v64, %v195
    %v258 = vadd.f32 %v65, %v200
    %v259 = vadd.f32 %v66, %v205
    %v260 = vadd.f32 %v67, %v210
    %v261 = vadd.f32 %v68, %v215
    %v262 = vadd.f32 %v69, %v220
    %v263 = vadd.f32 %v70, %v225
    %v264 = vadd.f32 %v71, %v230
    %v265 = vadd.f32 %v72, %v235
    %v266 = vadd.f32 %v73, %v240
    %v267 = vadd.f32 %v74, %v245
    %v268 = vadd.f32 %v75, %v250
    %269 = vst [vmem:[#allocation2] sm:$0xff] %v253
    %270 = vst [vmem:[#allocation2 + $0x8] sm:$0xff] %v254
    %271 = vst [vmem:[#allocation2 + $0x10] sm:$0xff] %v255
    %272 = vst [vmem:[#allocation2 + $0x18] sm:$0xff] %v256
    %273 = vst [vmem:[#allocation2 + $0x20] sm:$0xff] %v257
    %274 = vst [vmem:[#allocation2 + $0x28] sm:$0xff] %v258
    %275 = vst [vmem:[#allocation2 + $0x30] sm:$0xff] %v259
    %276 = vst [vmem:[#allocation2 + $0x38] sm:$0xff] %v260
    %277 = vst [vmem:[#allocation2 + $0x40] sm:$0xff] %v261
    %278 = vst [vmem:[#allocation2 + $0x48] sm:$0xff] %v262
    %279 = vst [vmem:[#allocation2 + $0x50] sm:$0xff] %v263
    %280 = vst [vmem:[#allocation2 + $0x58] sm:$0xff] %v264
    %281 = vst [vmem:[#allocation2 + $0x60] sm:$0xff] %v265
    %282 = vst [vmem:[#allocation2 + $0x68] sm:$0xff] %v266
    %283 = vst [vmem:[#allocation2 + $0x70] sm:$0xff] %v267
    %284 = vst [vmem:[#allocation2 + $0x78] sm:$0xff] %v268
    // Predicated region
    $region22: #{tpu_custom_call.1} parent=1 // pred_check
      %p285 = pneg %p40
    $region23: #{tpu_custom_call.1} parent=1 // pred_check_branch
      %287 = sbr.rel (%p285) target = $region25
    $region24: #{tpu_custom_call.1} parent=1 // pred_region
      %v288 = vld [vmem:[#allocation2] sm:$0xff]
      %v289 = vld [vmem:[#allocation2 + $0x8] sm:$0xff]
      %v290 = vld [vmem:[#allocation2 + $0x10] sm:$0xff]
      %v291 = vld [vmem:[#allocation2 + $0x18] sm:$0xff]
      %v292 = vld [vmem:[#allocation2 + $0x20] sm:$0xff]
      %v293 = vld [vmem:[#allocation2 + $0x28] sm:$0xff]
      %v294 = vld [vmem:[#allocation2 + $0x30] sm:$0xff]
      %v295 = vld [vmem:[#allocation2 + $0x38] sm:$0xff]
      %v296 = vld [vmem:[#allocation2 + $0x40] sm:$0xff]
      %v297 = vld [vmem:[#allocation2 + $0x48] sm:$0xff]
      %v298 = vld [vmem:[#allocation2 + $0x50] sm:$0xff]
      %v299 = vld [vmem:[#allocation2 + $0x58] sm:$0xff]
      %v300 = vld [vmem:[#allocation2 + $0x60] sm:$0xff]
      %v301 = vld [vmem:[#allocation2 + $0x68] sm:$0xff]
      %v302 = vld [vmem:[#allocation2 + $0x70] sm:$0xff]
      %v303 = vld [vmem:[#allocation2 + $0x78] sm:$0xff]
      %304 = vmatprep.subr.mxu0 0.0
      %305 = vmatpush1.msra.mxu0 %v288
      %306 = vmatprep.subr.mxu0 0.0
      %307 = vmatpush1.msra.mxu0 %v289
      %308 = vmatprep.subr.mxu0 0.0
      %309 = vmatpush1.msra.mxu0 %v290
      %310 = vmatprep.subr.mxu0 0.0
      %311 = vmatpush1.msra.mxu0 %v291
      %312 = vmatprep.subr.mxu0 0.0
      %313 = vmatpush1.msra.mxu0 %v292
      %314 = vmatprep.subr.mxu0 0.0
      %315 = vmatpush1.msra.mxu0 %v293
      %316 = vmatprep.subr.mxu0 0.0
      %317 = vmatpush1.msra.mxu0 %v294
      %318 = vmatprep.subr.mxu0 0.0
      %319 = vmatpush1.msra.mxu0 %v295
      %320 = vmatprep.subr.mxu0 0.0
      %321 = vmatpush1.msra.mxu0 %v296
      %322 = vmatprep.subr.mxu0 0.0
      %323 = vmatpush1.msra.mxu0 %v297
      %324 = vmatprep.subr.mxu0 0.0
      %325 = vmatpush1.msra.mxu0 %v298
      %326 = vmatprep.subr.mxu0 0.0
      %327 = vmatpush1.msra.mxu0 %v299
      %328 = vmatprep.subr.mxu0 0.0
      %329 = vmatpush1.msra.mxu0 %v300
      %330 = vmatprep.subr.mxu0 0.0
      %331 = vmatpush1.msra.mxu0 %v301
      %332 = vmatprep.subr.mxu0 0.0
      %333 = vmatpush1.msra.mxu0 %v302
      %334 = vmatprep.subr.mxu0 0.0
      %335 = vmatpush1.msra.mxu0 %v303
      %336 = vmatprep.subr.mxu0 0.0
      %337 = vmatpush1.msra.mxu0 0.0
      %338 = vmatprep.subr.mxu0 0.0
      %339 = vmatpush1.msra.mxu0 0.0
      %340 = vmatprep.subr.mxu0 0.0
      %341 = vmatpush1.msra.mxu0 0.0
      %342 = vmatprep.subr.mxu0 0.0
      %343 = vmatpush1.msra.mxu0 0.0
      %344 = vmatprep.subr.mxu0 0.0
      %345 = vmatpush1.msra.mxu0 0.0
      %346 = vmatprep.subr.mxu0 0.0
      %347 = vmatpush1.msra.mxu0 0.0
      %348 = vmatprep.subr.mxu0 0.0
      %349 = vmatpush1.msra.mxu0 0.0
      %350 = vmatprep.subr.mxu0 0.0
      %351 = vmatpush1.msra.mxu0 0.0
      %352 = vmatprep.subr.mxu0 0.0
      %353 = vmatpush1.msra.mxu0 0.0
      %354 = vmatprep.subr.mxu0 0.0
      %355 = vmatpush1.msra.mxu0 0.0
      %356 = vmatprep.subr.mxu0 0.0
      %357 = vmatpush1.msra.mxu0 0.0
      %358 = vmatprep.subr.mxu0 0.0
      %359 = vmatpush1.msra.mxu0 0.0
      %360 = vmatprep.subr.mxu0 0.0
      %361 = vmatpush1.msra.mxu0 0.0
      %362 = vmatprep.subr.mxu0 0.0
      %363 = vmatpush1.msra.mxu0 0.0
      %364 = vmatprep.subr.mxu0 0.0
      %365 = vmatpush1.msra.mxu0 0.0
      %366 = vmatprep.subr.mxu0 0.0
      %367 = vmatpush1.msra.mxu0 0.0
      %368 = vmatprep.mubr.f32.mxu0 0.0
      %369 = vmatmul.mubr.f32.gmra.mrb[0].mxu0 %v288
      %v370 = vpop.f32.mrb[0].mxu0
      %v371 = vadd.f32 0.0, %v370
      %v372 = vpop.f32.mrb[0].mxu0
      %373 = vmatprep.mubr.f32.mxu0 0.0
      %374 = vmatmul.mubr.f32.gmra.mrb[0].mxu0 %v289
      %v375 = vpop.f32.mrb[0].mxu0
      %v376 = vadd.f32 0.0, %v375
      %v377 = vpop.f32.mrb[0].mxu0
      %378 = vmatprep.mubr.f32.mxu0 0.0
      %379 = vmatmul.mubr.f32.gmra.mrb[0].mxu0 %v290
      %v380 = vpop.f32.mrb[0].mxu0
      %v381 = vadd.f32 0.0, %v380
      %v382 = vpop.f32.mrb[0].mxu0
      %383 = vmatprep.mubr.f32.mxu0 0.0
      %384 = vmatmul.mubr.f32.gmra.mrb[0].mxu0 %v291
      %v385 = vpop.f32.mrb[0].mxu0
      %v386 = vadd.f32 0.0, %v385
      %v387 = vpop.f32.mrb[0].mxu0
      %388 = vmatprep.mubr.f32.mxu0 0.0
      %389 = vmatmul.mubr.f32.gmra.mrb[0].mxu0 %v292
      %v390 = vpop.f32.mrb[0].mxu0
      %v391 = vadd.f32 0.0, %v390
      %v392 = vpop.f32.mrb[0].mxu0
      %393 = vmatprep.mubr.f32.mxu0 0.0
      %394 = vmatmul.mubr.f32.gmra.mrb[0].mxu0 %v293
      %v395 = vpop.f32.mrb[0].mxu0
      %v396 = vadd.f32 0.0, %v395
      %v397 = vpop.f32.mrb[0].mxu0
      %398 = vmatprep.mubr.f32.mxu0 0.0
      %399 = vmatmul.mubr.f32.gmra.mrb[0].mxu0 %v294
      %v400 = vpop.f32.mrb[0].mxu0
      %v401 = vadd.f32 0.0, %v400
      %v402 = vpop.f32.mrb[0].mxu0
      %403 = vmatprep.mubr.f32.mxu0 0.0
      %404 = vmatmul.mubr.f32.gmra.mrb[0].mxu0 %v295
      %v405 = vpop.f32.mrb[0].mxu0
      %v406 = vadd.f32 0.0, %v405
      %v407 = vpop.f32.mrb[0].mxu0
      %408 = vmatprep.mubr.f32.mxu0 0.0
      %409 = vmatmul.mubr.f32.gmra.mrb[0].mxu0 %v296
      %v410 = vpop.f32.mrb[0].mxu0
      %v411 = vadd.f32 0.0, %v410
      %v412 = vpop.f32.mrb[0].mxu0
      %413 = vmatprep.mubr.f32.mxu0 0.0
      %414 = vmatmul.mubr.f32.gmra.mrb[0].mxu0 %v297
      %v415 = vpop.f32.mrb[0].mxu0
      %v416 = vadd.f32 0.0, %v415
      %v417 = vpop.f32.mrb[0].mxu0
      %418 = vmatprep.mubr.f32.mxu0 0.0
      %419 = vmatmul.mubr.f32.gmra.mrb[0].mxu0 %v298
      %v420 = vpop.f32.mrb[0].mxu0
      %v421 = vadd.f32 0.0, %v420
      %v422 = vpop.f32.mrb[0].mxu0
      %423 = vmatprep.mubr.f32.mxu0 0.0
      %424 = vmatmul.mubr.f32.gmra.mrb[0].mxu0 %v299
      %v425 = vpop.f32.mrb[0].mxu0
      %v426 = vadd.f32 0.0, %v425
      %v427 = vpop.f32.mrb[0].mxu0
      %428 = vmatprep.mubr.f32.mxu0 0.0
      %429 = vmatmul.mubr.f32.gmra.mrb[0].mxu0 %v300
      %v430 = vpop.f32.mrb[0].mxu0
      %v431 = vadd.f32 0.0, %v430
      %v432 = vpop.f32.mrb[0].mxu0
      %433 = vmatprep.mubr.f32.mxu0 0.0
      %434 = vmatmul.mubr.f32.gmra.mrb[0].mxu0 %v301
      %v435 = vpop.f32.mrb[0].mxu0
      %v436 = vadd.f32 0.0, %v435
      %v437 = vpop.f32.mrb[0].mxu0
      %438 = vmatprep.mubr.f32.mxu0 0.0
      %439 = vmatmul.mubr.f32.gmra.mrb[0].mxu0 %v302
      %v440 = vpop.f32.mrb[0].mxu0
      %v441 = vadd.f32 0.0, %v440
      %v442 = vpop.f32.mrb[0].mxu0
      %443 = vmatprep.mubr.f32.mxu0 0.0
      %444 = vmatmul.mubr.f32.gmra.mrb[0].mxu0 %v303
      %v445 = vpop.f32.mrb[0].mxu0
      %v446 = vadd.f32 0.0, %v445
      %v447 = vpop.f32.mrb[0].mxu0
      %448 = vdwg.mxu0
      %v449 = vadd.f32 %v288, %v371
      %v450 = vadd.f32 %v289, %v376
      %v451 = vadd.f32 %v290, %v381
      %v452 = vadd.f32 %v291, %v386
      %v453 = vadd.f32 %v292, %v391
      %v454 = vadd.f32 %v293, %v396
      %v455 = vadd.f32 %v294, %v401
      %v456 = vadd.f32 %v295, %v406
      %v457 = vadd.f32 %v296, %v411
      %v458 = vadd.f32 %v297, %v416
      %v459 = vadd.f32 %v298, %v421
      %v460 = vadd.f32 %v299, %v426
      %v461 = vadd.f32 %v300, %v431
      %v462 = vadd.f32 %v301, %v436
      %v463 = vadd.f32 %v302, %v441
      %v464 = vadd.f32 %v303, %v446
      %465 = vst [vmem:[#allocation8] sm:$0xff] %v449
      %466 = vst [vmem:[#allocation8 + $0x10] sm:$0xff] %v450
      %467 = vst [vmem:[#allocation8 + $0x20] sm:$0xff] %v451
      %468 = vst [vmem:[#allocation8 + $0x30] sm:$0xff] %v452
      %469 = vst [vmem:[#allocation8 + $0x40] sm:$0xff] %v453
      %470 = vst [vmem:[#allocation8 + $0x50] sm:$0xff] %v454
      %471 = vst [vmem:[#allocation8 + $0x60] sm:$0xff] %v455
      %472 = vst [vmem:[#allocation8 + $0x70] sm:$0xff] %v456
      %473 = vst [vmem:[#allocation8 + $0x80] sm:$0xff] %v457
      %474 = vst [vmem:[#allocation8 + $0x90] sm:$0xff] %v458
      %475 = vst [vmem:[#allocation8 + $0xa0] sm:$0xff] %v459
      %476 = vst [vmem:[#allocation8 + $0xb0] sm:$0xff] %v460
      %477 = vst [vmem:[#allocation8 + $0xc0] sm:$0xff] %v461
      %478 = vst [vmem:[#allocation8 + $0xd0] sm:$0xff] %v462
      %479 = vst [vmem:[#allocation8 + $0xe0] sm:$0xff] %v463
      %480 = vst [vmem:[#allocation8 + $0xf0] sm:$0xff] %v464
      %481 = vst [vmem:[#allocation8 + $0x8] sm:$0xff] %v449
      %482 = vst [vmem:[#allocation8 + $0x18] sm:$0xff] %v450
      %483 = vst [vmem:[#allocation8 + $0x28] sm:$0xff] %v451
      %484 = vst [vmem:[#allocation8 + $0x38] sm:$0xff] %v452
      %485 = vst [vmem:[#allocation8 + $0x48] sm:$0xff] %v453
      %486 = vst [vmem:[#allocation8 + $0x58] sm:$0xff] %v454
      %487 = vst [vmem:[#allocation8 + $0x68] sm:$0xff] %v455
      %488 = vst [vmem:[#allocation8 + $0x78] sm:$0xff] %v456
      %489 = vst [vmem:[#allocation8 + $0x88] sm:$0xff] %v457
      %490 = vst [vmem:[#allocation8 + $0x98] sm:$0xff] %v458
      %491 = vst [vmem:[#allocation8 + $0xa8] sm:$0xff] %v459
      %492 = vst [vmem:[#allocation8 + $0xb8] sm:$0xff] %v460
      %493 = vst [vmem:[#allocation8 + $0xc8] sm:$0xff] %v461
      %494 = vst [vmem:[#allocation8 + $0xd8] sm:$0xff] %v462
      %495 = vst [vmem:[#allocation8 + $0xe8] sm:$0xff] %v463
      %496 = vst [vmem:[#allocation8 + $0xf8] sm:$0xff] %v464
    $region25: #{tpu_custom_call.1} parent=1 // pred_fallthru
      _
    // Predicated region
    $region26: #{tpu_custom_call.1} parent=1 // pred_check
      _
    $region27: #{tpu_custom_call.1} parent=1 // pred_check_branch
      %498 = sbr.rel (0) target = $region29
    $region28: #{tpu_custom_call.1} parent=1 // pred_region
      %s500 = ssub.s32 4096, 4096
      %501 = vsyncadd [#allocation5], %s500
      %s502 = sshll.u32 [#allocation8], 4
      %s503 = int_to_ptr.vmem [resolvable:$true] %s502
      %508 = dma.vmem_to_hbm [thread:$0]  %s503, 4096, %s2, [#allocation5], 256, 256, 16
    $region29: #{tpu_custom_call.1} parent=1 // pred_fallthru
      _
    // Predicated region
    $region30: #{tpu_custom_call.1} parent=1 // pred_check
      _
    $region31: #{tpu_custom_call.1} parent=1 // pred_check_branch
      %510 = sbr.rel (0) target = $region33
    $region32: #{tpu_custom_call.1} parent=1 // pred_region
      %511 = dma.done [#allocation5], 4096
    $region33: #{tpu_custom_call.1} parent=1 // pred_fallthru
      _
    %512 = vsyncpa [#allocation4], 1
    %513 = vsyncpa [#allocation7], 1
    %514 = vsyncpa [#allocation5], 1

</llo_original>
